<compile_context>
chip_gen: v7x
topology: tpu7x:2x2x1
jax: 0.10.0
libtpu: 0.0.40
codegen_flags: <defaults>
</compile_context>

<pallas_src>
import jax
import jax.numpy as jnp
from jax.experimental import pallas as pl
from jax.experimental.pallas import tpu as pltpu

IN_DIM = 3
HID_DIM = 64
OUT_DIM = 28 * 28        # 784 (= 6*128 + 16, lane-unaligned)
OUT_DIM_PAD = 896        # 7 * 128, lane-aligned


def _round_up(a, m):
    return (a + m - 1) // m * m


def decoder_kernel(x_ref, w1_ref, b1_ref, w2_ref, b2_ref, o_ref):
    # ---- Layer 1: (TB,3) x (3,64) as three VPU broadcast-FMAs (skip MXU) ----
    x = x_ref[...]                      # (TB, 3)  f32
    w1 = w1_ref[...]                    # (3, 64)  f32
    h = (b1_ref[...]                    # (1, 64) broadcast over sublanes
         + x[:, 0:1] * w1[0:1, :]
         + x[:, 1:2] * w1[1:2, :]
         + x[:, 2:3] * w1[2:3, :])      # (TB, 64) f32
    h = jnp.maximum(h, 0.0)             # ReLU

    # ---- Layer 2: (TB,64) @ (64,896) on the MXU, f32 in / f32 accumulate ----
    y = jnp.dot(h, w2_ref[...], preferred_element_type=jnp.float32)
    o_ref[...] = (y + b2_ref[...]).astype(o_ref.dtype)   # (TB, 896) f32


def prepare_params(w1, b1, w2, b2):
    """Pad the output dim 784 -> 896 with zero columns.

    Weights are stored as (in_features, out_features) so the kernel computes
    x @ W + b (equivalent to PyTorch's x @ W.T + b with W transposed).
    """
    w1p = w1.astype(jnp.float32)
    b1p = b1.reshape(1, HID_DIM).astype(jnp.float32)
    w2p = jnp.pad(w2.astype(jnp.float32),
                  ((0, 0), (0, OUT_DIM_PAD - w2.shape[1])))
    b2p = jnp.pad(b2.reshape(1, -1).astype(jnp.float32),
                  ((0, 0), (0, OUT_DIM_PAD - b2.shape[-1])))
    return w1p, b1p, w2p, b2p


def decoder_forward(x, w1p, b1p, w2p, b2p, *, block_b=512):
    """x: (B, 3) f32; params from prepare_params. Returns (B, 784) f32."""
    x = x.astype(jnp.float32)
    B = x.shape[0]
    # Batch tile: multiple of 8, capped at block_b. With TB=512 the
    # double-buffered output tile is ~3.5 MiB, well under the scoped-VMEM
    # default on every chip generation.
    TB = min(block_b, _round_up(B, 8))
    Bp = _round_up(B, TB)
    if Bp != B:
        x = jnp.pad(x, ((0, Bp - B), (0, 0)))
    grid = (pl.cdiv(Bp, TB),)

    out = pl.pallas_call(
        decoder_kernel,
        out_shape=jax.ShapeDtypeStruct((Bp, OUT_DIM_PAD), jnp.float32),
        grid=grid,
        in_specs=[
            # x tiled over the batch axis.
            pl.BlockSpec((TB, IN_DIM), lambda i: (i, 0)),
            # Weights/biases: constant block index -> stay VMEM-resident.
            pl.BlockSpec((IN_DIM, HID_DIM), lambda i: (0, 0)),
            pl.BlockSpec((1, HID_DIM), lambda i: (0, 0)),
            pl.BlockSpec((HID_DIM, OUT_DIM_PAD), lambda i: (0, 0)),
            pl.BlockSpec((1, OUT_DIM_PAD), lambda i: (0, 0)),
        ],
        out_specs=pl.BlockSpec((TB, OUT_DIM_PAD), lambda i: (i, 0)),
        compiler_params=pltpu.CompilerParams(
            # Batch axis is fully independent -> shard across TensorCores on
            # v7x (no-op on single-TC v5e/v6e).
            dimension_semantics=("parallel",),
            vmem_limit_bytes=32 * 1024 * 1024,
        ),
    )(x, w1p, b1p, w2p, b2p)

    # Strip batch padding and the 784 -> 896 lane padding.
    return out[:B, :OUT_DIM]


def init_params(key):
    # Deterministic init mimicking PyTorch nn.Linear default:
    # U(-1/sqrt(fan_in), 1/sqrt(fan_in)) for both weight and bias.
    k1, k2, k3, k4 = jax.random.split(key, 4)
    bound1 = 1.0 / jnp.sqrt(jnp.float32(IN_DIM))
    bound2 = 1.0 / jnp.sqrt(jnp.float32(HID_DIM))
    # Stored as (in_features, out_features) so kernel computes x @ W.
    w1 = jax.random.uniform(k1, (IN_DIM, HID_DIM), jnp.float32, -bound1, bound1)
    b1 = jax.random.uniform(k2, (1, HID_DIM), jnp.float32, -bound1, bound1)
    w2 = jax.random.uniform(k3, (HID_DIM, OUT_DIM), jnp.float32, -bound2, bound2)
    b2 = jax.random.uniform(k4, (1, OUT_DIM), jnp.float32, -bound2, bound2)
    return w1, b1, w2, b2


if __name__ == "__main__":
    key = jax.random.PRNGKey(0)
    k_params, k_x = jax.random.split(key)

    w1, b1, w2, b2 = init_params(k_params)
    w1p, b1p, w2p, b2p = prepare_params(w1, b1, w2, b2)

    B = 8  # small batch; latent dim is 3 per the module definition
    x = jax.random.normal(k_x, (B, IN_DIM), jnp.float32)

    out = decoder_forward(x, w1p, b1p, w2p, b2p)
    out = jax.block_until_ready(out)
    assert out.shape == (B, OUT_DIM)

    # Pure-f32 reference matching the PyTorch module's math.
    h_ref = jnp.maximum(x @ w1 + b1, 0.0)
    ref_f32 = h_ref @ w2 + b2
    assert jnp.allclose(out, ref_f32, atol=1e-4, rtol=1e-4), (
        float(jnp.max(jnp.abs(out - ref_f32))))

    print("KERNEL_OK")
</pallas_src>

<mosaic_0001>
module attributes {stable_mosaic.version = 11 : i64} {
  func.func @decoder_kernel(%arg0: i32, %arg1: memref<8x3xf32, #tpu.memory_space<vmem>>, %arg2: memref<3x64xf32, #tpu.memory_space<vmem>>, %arg3: memref<1x64xf32, #tpu.memory_space<vmem>>, %arg4: memref<64x896xf32, #tpu.memory_space<vmem>>, %arg5: memref<1x896xf32, #tpu.memory_space<vmem>>, %arg6: memref<8x896xf32, #tpu.memory_space<vmem>>) attributes {dimension_semantics = [#tpu.dimension_semantics<parallel>], iteration_bounds = array<i64: 1>, scalar_prefetch = 0 : i64, scratch_operands = 0 : i64, tpu.core_type = #tpu.core_type<tc>, window_params = [{transform_indices = @transform_0, window_bounds = array<i64: 8, 3>}, {pipeline_mode = #tpu.pipeline_mode<synchronous>, transform_indices = @transform_1, window_bounds = array<i64: 3, 64>}, {pipeline_mode = #tpu.pipeline_mode<synchronous>, transform_indices = @transform_2, window_bounds = array<i64: 1, 64>}, {pipeline_mode = #tpu.pipeline_mode<synchronous>, transform_indices = @transform_3, window_bounds = array<i64: 64, 896>}, {pipeline_mode = #tpu.pipeline_mode<synchronous>, transform_indices = @transform_4, window_bounds = array<i64: 1, 896>}, {transform_indices = @transform_5, window_bounds = array<i64: 8, 896>}]} {
    %c0 = arith.constant 0 : index
    %c0_0 = arith.constant 0 : index
    %0 = vector.load %arg1[%c0, %c0_0] : memref<8x3xf32, #tpu.memory_space<vmem>>, vector<8x3xf32>
    %c0_1 = arith.constant 0 : index
    %c0_2 = arith.constant 0 : index
    %1 = vector.load %arg2[%c0_1, %c0_2] : memref<3x64xf32, #tpu.memory_space<vmem>>, vector<3x64xf32>
    %c0_3 = arith.constant 0 : index
    %c0_4 = arith.constant 0 : index
    %2 = vector.load %arg3[%c0_3, %c0_4] : memref<1x64xf32, #tpu.memory_space<vmem>>, vector<1x64xf32>
    %3 = vector.extract_strided_slice %0 {offsets = [0, 0], sizes = [8, 1], strides = [1, 1]} : vector<8x3xf32> to vector<8x1xf32>
    %4 = vector.extract_strided_slice %1 {offsets = [0, 0], sizes = [1, 64], strides = [1, 1]} : vector<3x64xf32> to vector<1x64xf32>
    %5 = vector.broadcast %3 : vector<8x1xf32> to vector<8x64xf32>
    %6 = vector.broadcast %4 : vector<1x64xf32> to vector<8x64xf32>
    %7 = arith.mulf %5, %6 : vector<8x64xf32>
    %8 = vector.broadcast %2 : vector<1x64xf32> to vector<8x64xf32>
    %9 = arith.addf %8, %7 : vector<8x64xf32>
    %10 = vector.extract_strided_slice %0 {offsets = [0, 1], sizes = [8, 1], strides = [1, 1]} : vector<8x3xf32> to vector<8x1xf32>
    %11 = vector.extract_strided_slice %1 {offsets = [1, 0], sizes = [1, 64], strides = [1, 1]} : vector<3x64xf32> to vector<1x64xf32>
    %12 = vector.broadcast %10 : vector<8x1xf32> to vector<8x64xf32>
    %13 = vector.broadcast %11 : vector<1x64xf32> to vector<8x64xf32>
    %14 = arith.mulf %12, %13 : vector<8x64xf32>
    %15 = arith.addf %9, %14 : vector<8x64xf32>
    %16 = vector.extract_strided_slice %0 {offsets = [0, 2], sizes = [8, 1], strides = [1, 1]} : vector<8x3xf32> to vector<8x1xf32>
    %17 = vector.extract_strided_slice %1 {offsets = [2, 0], sizes = [1, 64], strides = [1, 1]} : vector<3x64xf32> to vector<1x64xf32>
    %18 = vector.broadcast %16 : vector<8x1xf32> to vector<8x64xf32>
    %19 = vector.broadcast %17 : vector<1x64xf32> to vector<8x64xf32>
    %20 = arith.mulf %18, %19 : vector<8x64xf32>
    %21 = arith.addf %15, %20 : vector<8x64xf32>
    %cst = arith.constant 0.000000e+00 : f32
    %22 = vector.broadcast %cst : f32 to vector<8x64xf32>
    %23 = arith.maximumf %21, %22 : vector<8x64xf32>
    %c0_5 = arith.constant 0 : index
    %c0_6 = arith.constant 0 : index
    %24 = vector.load %arg4[%c0_5, %c0_6] : memref<64x896xf32, #tpu.memory_space<vmem>>, vector<64x896xf32>
    %cst_7 = arith.constant dense<0.000000e+00> : vector<8x896xf32>
    %25 = tpu.matmul %23, %24, %cst_7 {dimension_numbers = #tpu.dot_dimension_numbers<[1], [0], [0], [1], [0, 0, 1, 1], [], []>} : vector<8x64xf32>, vector<64x896xf32>, vector<8x896xf32> -> vector<8x896xf32>
    %c0_8 = arith.constant 0 : index
    %c0_9 = arith.constant 0 : index
    %26 = vector.load %arg5[%c0_8, %c0_9] : memref<1x896xf32, #tpu.memory_space<vmem>>, vector<1x896xf32>
    %27 = vector.broadcast %26 : vector<1x896xf32> to vector<8x896xf32>
    %28 = arith.addf %25, %27 : vector<8x896xf32>
    %c0_10 = arith.constant 0 : index
    %c0_11 = arith.constant 0 : index
    %29 = vector.load %arg6[%c0_10, %c0_11] : memref<8x896xf32, #tpu.memory_space<vmem>>, vector<8x896xf32>
    tpu.vector_store %arg6[%c0_10, %c0_11], %28 {strides = array<i32>} : memref<8x896xf32, #tpu.memory_space<vmem>>, vector<8x896xf32>,
    return
  }
  func.func @transform_0(%arg0: i32) -> (i32, i32) {
    %c0_i32 = arith.constant 0 : i32
    %c0_i32_0 = arith.constant 0 : i32
    return %arg0, %c0_i32 : i32, i32
  }
  func.func @transform_1(%arg0: i32) -> (i32, i32) {
    %c0_i32 = arith.constant 0 : i32
    %c0_i32_0 = arith.constant 0 : i32
    %c0_i32_1 = arith.constant 0 : i32
    return %c0_i32, %c0_i32_0 : i32, i32
  }
  func.func @transform_2(%arg0: i32) -> (i32, i32) {
    %c0_i32 = arith.constant 0 : i32
    %c0_i32_0 = arith.constant 0 : i32
    %c0_i32_1 = arith.constant 0 : i32
    return %c0_i32, %c0_i32_0 : i32, i32
  }
  func.func @transform_3(%arg0: i32) -> (i32, i32) {
    %c0_i32 = arith.constant 0 : i32
    %c0_i32_0 = arith.constant 0 : i32
    %c0_i32_1 = arith.constant 0 : i32
    return %c0_i32, %c0_i32_0 : i32, i32
  }
  func.func @transform_4(%arg0: i32) -> (i32, i32) {
    %c0_i32 = arith.constant 0 : i32
    %c0_i32_0 = arith.constant 0 : i32
    %c0_i32_1 = arith.constant 0 : i32
    return %c0_i32, %c0_i32_0 : i32, i32
  }
  func.func @transform_5(%arg0: i32) -> (i32, i32) {
    %c0_i32 = arith.constant 0 : i32
    %c0_i32_0 = arith.constant 0 : i32
    return %arg0, %c0_i32 : i32, i32
  }
}

</mosaic_0001>

<llo_original>
// kernel: tpu_custom_call.1
$region0: #{tpu_custom_call.1}
  #allocation0 [shape = 'u32[]', space=smem, size = 0x4, offset = 0x4, fixed_abs, tag = 'smem constant byte address 0x4 - core index']
  #allocation1 [shape = 'u32[144,128]{1,0:T(1,128)}', space=vmem, size = 0x12000, scoped, tag = 'internal scratch']
  %s0 = inlined_call_operand.vmem [shape: f32[8,3], index: 0, kind: input, shape index: {}]
  %s1 = inlined_call_operand.vmem [shape: f32[3,64], index: 1, kind: input, shape index: {}]
  %s2 = inlined_call_operand.vmem [shape: f32[1,64], index: 2, kind: input, shape index: {}]
  %s3 = inlined_call_operand.hbm [shape: f32[64,896], index: 3, kind: input, shape index: {}]
  %s4 = inlined_call_operand.vmem [shape: f32[1,896], index: 4, kind: input, shape index: {}]
  %s5 = inlined_call_operand.hbm [shape: f32[8,896], index: 5, kind: output, shape index: {}]
  %s6 = sld [smem:[#allocation0]]
  $region34: #{tpu_custom_call.1} parent=0
    _
  %s8 = ssub.s32 1, %s6
  %s9 = scalar_select 0, %s8, %s6
  $region1: #{tpu_custom_call.1} parent=0
    #allocation2 [shape = 'u8[229376]{0}', space=vmem, size = 0x38000, scoped, tag = 'input window, operand 3, single buffered']
    #allocation3 [shape = 's32[1]{0}', space=sflag, size = 0x4, scoped, tag = 'scoped memory for tpu_custom_call.1']
    #allocation4 [shape = 's32[1]{0}', space=sflag, size = 0x4, scoped, tag = 'scoped memory for tpu_custom_call.1']
    #allocation5 [shape = 'u8[28672]{0}', space=vmem, size = 0x7000, scoped, tag = 'output window, operand 0, single buffered']
    %10 = vsyncpa [#allocation3], 0
    %11 = vsyncpa [#allocation4], 0
    // Predicated region
    $region2: #{tpu_custom_call.1} parent=1 // pred_check
      _
    $region3: #{tpu_custom_call.1} parent=1 // pred_check_branch
      %13 = sbr.rel (0) target = $region5
    $region4: #{tpu_custom_call.1} parent=1 // pred_region
      _
    $region5: #{tpu_custom_call.1} parent=1 // pred_fallthru
      _
    // Predicated region
    $region6: #{tpu_custom_call.1} parent=1 // pred_check
      _
    $region7: #{tpu_custom_call.1} parent=1 // pred_check_branch
      %15 = sbr.rel (0) target = $region9
    $region8: #{tpu_custom_call.1} parent=1 // pred_region
      _
    $region9: #{tpu_custom_call.1} parent=1 // pred_fallthru
      _
    // Predicated region
    $region10: #{tpu_custom_call.1} parent=1 // pred_check
      _
    $region11: #{tpu_custom_call.1} parent=1 // pred_check_branch
      %17 = sbr.rel (0) target = $region13
    $region12: #{tpu_custom_call.1} parent=1 // pred_region
      _
    $region13: #{tpu_custom_call.1} parent=1 // pred_fallthru
      _
    // Predicated region
    $region14: #{tpu_custom_call.1} parent=1 // pred_check
      _
    $region15: #{tpu_custom_call.1} parent=1 // pred_check_branch
      %19 = sbr.rel (0) target = $region17
    $region16: #{tpu_custom_call.1} parent=1 // pred_region
      %s21 = ssub.s32 7168, 7168
      %22 = vsyncadd [#allocation3], %s21
      %s23 = sshll.u32 [#allocation2], 4
      %s24 = int_to_ptr.vmem [resolvable:$true] %s23
      %29 = dma.hbm_to_vmem [thread:$0]  %s3, 7168, %s24, [#allocation3], 896, 896, 56
    $region17: #{tpu_custom_call.1} parent=1 // pred_fallthru
      _
    // Predicated region
    $region18: #{tpu_custom_call.1} parent=1 // pred_check
      _
    $region19: #{tpu_custom_call.1} parent=1 // pred_check_branch
      %31 = sbr.rel (0) target = $region21
    $region20: #{tpu_custom_call.1} parent=1 // pred_region
      _
    $region21: #{tpu_custom_call.1} parent=1 // pred_fallthru
      _
    // Predicated region
    $region22: #{tpu_custom_call.1} parent=1 // pred_check
      _
    $region23: #{tpu_custom_call.1} parent=1 // pred_check_branch
      %33 = sbr.rel (0) target = $region25
    $region24: #{tpu_custom_call.1} parent=1 // pred_region
      %34 = dma.done [#allocation3], 7168
    $region25: #{tpu_custom_call.1} parent=1 // pred_fallthru
      _
    %v35 = vld [vmem:[%s0] sm:$0xff]
    %v36 = vld [vmem:[%s1] sm:$0x7]
    %v37 = vld [vmem:[%s2] sm:$0x1]
    %39 = vset.pattern.permute.xlu0 0
    %40 = vperm.xlu0 %39, %v35
    %v41 = vpop.permute.xlu0 %40
    %v43 = vlaneseq
    %v44 = vshrl.u32 %v43, 7
    %v45 = vsub.s32 0, %v44
    %v46 = vrot.slane %v36, %v45
    %v47 = vmul.f32 %v41, %v46
    %v49 = vlaneseq
    %v50 = vshrl.u32 %v49, 7
    %v51 = vsub.s32 0, %v50
    %v52 = vrot.slane %v37, %v51
    %v54 = vadd.f32 %v52, %v47
    %55 = vset.pattern.permute.xlu0 1
    %56 = vperm.xlu0 %55, %v35
    %v57 = vpop.permute.xlu0 %56
    %v59 = vlaneseq
    %v60 = vshrl.u32 %v59, 7
    %v61 = vsub.s32 1, %v60
    %v62 = vrot.slane %v36, %v61
    %v63 = vmul.f32 %v57, %v62
    %v64 = vadd.f32 %v54, %v63
    %65 = vset.pattern.permute.xlu0 2
    %66 = vperm.xlu0 %65, %v35
    %v67 = vpop.permute.xlu0 %66
    %v69 = vlaneseq
    %v70 = vshrl.u32 %v69, 7
    %v71 = vsub.s32 2, %v70
    %v72 = vrot.slane %v36, %v71
    %v73 = vmul.f32 %v67, %v72
    %v74 = vadd.f32 %v64, %v73
    %v75 = vmax.f32 %v74, 0.0
    %v76 = vld [vmem:[#allocation2] sm:$0xff]
    %v77 = vld [vmem:[#allocation2 + $0x8] sm:$0xff]
    %v78 = vld [vmem:[#allocation2 + $0x10] sm:$0xff]
    %v79 = vld [vmem:[#allocation2 + $0x18] sm:$0xff]
    %v80 = vld [vmem:[#allocation2 + $0x20] sm:$0xff]
    %v81 = vld [vmem:[#allocation2 + $0x28] sm:$0xff]
    %v82 = vld [vmem:[#allocation2 + $0x30] sm:$0xff]
    %v83 = vld [vmem:[#allocation2 + $0x38] sm:$0xff]
    %v84 = vld [vmem:[#allocation2 + $0x40] sm:$0xff]
    %v85 = vld [vmem:[#allocation2 + $0x48] sm:$0xff]
    %v86 = vld [vmem:[#allocation2 + $0x50] sm:$0xff]
    %v87 = vld [vmem:[#allocation2 + $0x58] sm:$0xff]
    %v88 = vld [vmem:[#allocation2 + $0x60] sm:$0xff]
    %v89 = vld [vmem:[#allocation2 + $0x68] sm:$0xff]
    %v90 = vld [vmem:[#allocation2 + $0x70] sm:$0xff]
    %v91 = vld [vmem:[#allocation2 + $0x78] sm:$0xff]
    %v92 = vld [vmem:[#allocation2 + $0x80] sm:$0xff]
    %v93 = vld [vmem:[#allocation2 + $0x88] sm:$0xff]
    %v94 = vld [vmem:[#allocation2 + $0x90] sm:$0xff]
    %v95 = vld [vmem:[#allocation2 + $0x98] sm:$0xff]
    %v96 = vld [vmem:[#allocation2 + $0xa0] sm:$0xff]
    %v97 = vld [vmem:[#allocation2 + $0xa8] sm:$0xff]
    %v98 = vld [vmem:[#allocation2 + $0xb0] sm:$0xff]
    %v99 = vld [vmem:[#allocation2 + $0xb8] sm:$0xff]
    %v100 = vld [vmem:[#allocation2 + $0xc0] sm:$0xff]
    %v101 = vld [vmem:[#allocation2 + $0xc8] sm:$0xff]
    %v102 = vld [vmem:[#allocation2 + $0xd0] sm:$0xff]
    %v103 = vld [vmem:[#allocation2 + $0xd8] sm:$0xff]
    %v104 = vld [vmem:[#allocation2 + $0xe0] sm:$0xff]
    %v105 = vld [vmem:[#allocation2 + $0xe8] sm:$0xff]
    %v106 = vld [vmem:[#allocation2 + $0xf0] sm:$0xff]
    %v107 = vld [vmem:[#allocation2 + $0xf8] sm:$0xff]
    %v108 = vld [vmem:[#allocation2 + $0x100] sm:$0xff]
    %v109 = vld [vmem:[#allocation2 + $0x108] sm:$0xff]
    %v110 = vld [vmem:[#allocation2 + $0x110] sm:$0xff]
    %v111 = vld [vmem:[#allocation2 + $0x118] sm:$0xff]
    %v112 = vld [vmem:[#allocation2 + $0x120] sm:$0xff]
    %v113 = vld [vmem:[#allocation2 + $0x128] sm:$0xff]
    %v114 = vld [vmem:[#allocation2 + $0x130] sm:$0xff]
    %v115 = vld [vmem:[#allocation2 + $0x138] sm:$0xff]
    %v116 = vld [vmem:[#allocation2 + $0x140] sm:$0xff]
    %v117 = vld [vmem:[#allocation2 + $0x148] sm:$0xff]
    %v118 = vld [vmem:[#allocation2 + $0x150] sm:$0xff]
    %v119 = vld [vmem:[#allocation2 + $0x158] sm:$0xff]
    %v120 = vld [vmem:[#allocation2 + $0x160] sm:$0xff]
    %v121 = vld [vmem:[#allocation2 + $0x168] sm:$0xff]
    %v122 = vld [vmem:[#allocation2 + $0x170] sm:$0xff]
    %v123 = vld [vmem:[#allocation2 + $0x178] sm:$0xff]
    %v124 = vld [vmem:[#allocation2 + $0x180] sm:$0xff]
    %v125 = vld [vmem:[#allocation2 + $0x188] sm:$0xff]
    %v126 = vld [vmem:[#allocation2 + $0x190] sm:$0xff]
    %v127 = vld [vmem:[#allocation2 + $0x198] sm:$0xff]
    %v128 = vld [vmem:[#allocation2 + $0x1a0] sm:$0xff]
    %v129 = vld [vmem:[#allocation2 + $0x1a8] sm:$0xff]
    %v130 = vld [vmem:[#allocation2 + $0x1b0] sm:$0xff]
    %v131 = vld [vmem:[#allocation2 + $0x1b8] sm:$0xff]
    %v132 = vld [vmem:[%s4] sm:$0xff]
    %v134 = vlaneseq
    %v135 = vshrl.u32 %v134, 7
    %v136 = vsub.s32 0, %v135
    %v137 = vrot.slane %v132, %v136
    %v138 = vlaneseq
    %v139 = vshrl.u32 %v138, 7
    %v140 = vsub.s32 1, %v139
    %v141 = vrot.slane %v132, %v140
    %v142 = vlaneseq
    %v143 = vshrl.u32 %v142, 7
    %v144 = vsub.s32 2, %v143
    %v145 = vrot.slane %v132, %v144
    %v146 = vlaneseq
    %v147 = vshrl.u32 %v146, 7
    %v148 = vsub.s32 3, %v147
    %v149 = vrot.slane %v132, %v148
    %v150 = vlaneseq
    %v151 = vshrl.u32 %v150, 7
    %v152 = vsub.s32 4, %v151
    %v153 = vrot.slane %v132, %v152
    %v154 = vlaneseq
    %v155 = vshrl.u32 %v154, 7
    %v156 = vsub.s32 5, %v155
    %v157 = vrot.slane %v132, %v156
    %v158 = vlaneseq
    %v159 = vshrl.u32 %v158, 7
    %v160 = vsub.s32 6, %v159
    %v161 = vrot.slane %v132, %v160
    %vm169 = vcmask 523264
    %v171 = vsel %vm169, %v75, 0
    %173 = vmatprep.subr.mxu0 %v77
    %174 = vmatpush1.msra.mxu0 %v76
    %175 = vmatprep.subr.mxu0 %v84
    %176 = vmatpush1.msra.mxu0 %v83
    %177 = vmatprep.subr.mxu0 %v91
    %178 = vmatpush1.msra.mxu0 %v90
    %179 = vmatprep.subr.mxu0 %v98
    %180 = vmatpush1.msra.mxu0 %v97
    %181 = vmatprep.subr.mxu0 %v105
    %182 = vmatpush1.msra.mxu0 %v104
    %183 = vmatprep.subr.mxu0 %v112
    %184 = vmatpush1.msra.mxu0 %v111
    %185 = vmatprep.subr.mxu0 %v119
    %186 = vmatpush1.msra.mxu0 %v118
    %187 = vmatprep.subr.mxu0 %v126
    %188 = vmatpush1.msra.mxu0 %v125
    %189 = vmatprep.subr.mxu0 0.0
    %190 = vmatpush1.msra.mxu0 0.0
    %191 = vmatprep.subr.mxu0 0.0
    %192 = vmatpush1.msra.mxu0 0.0
    %193 = vmatprep.subr.mxu0 0.0
    %194 = vmatpush1.msra.mxu0 0.0
    %195 = vmatprep.subr.mxu0 0.0
    %196 = vmatpush1.msra.mxu0 0.0
    %197 = vmatprep.subr.mxu0 0.0
    %198 = vmatpush1.msra.mxu0 0.0
    %199 = vmatprep.subr.mxu0 0.0
    %200 = vmatpush1.msra.mxu0 0.0
    %201 = vmatprep.subr.mxu0 0.0
    %202 = vmatpush1.msra.mxu0 0.0
    %203 = vmatprep.subr.mxu0 0.0
    %204 = vmatpush1.msra.mxu0 0.0
    %205 = vmatprep.subr.mxu0 0.0
    %206 = vmatpush1.msra.mxu0 0.0
    %207 = vmatprep.subr.mxu0 0.0
    %208 = vmatpush1.msra.mxu0 0.0
    %209 = vmatprep.subr.mxu0 0.0
    %210 = vmatpush1.msra.mxu0 0.0
    %211 = vmatprep.subr.mxu0 0.0
    %212 = vmatpush1.msra.mxu0 0.0
    %213 = vmatprep.subr.mxu0 0.0
    %214 = vmatpush1.msra.mxu0 0.0
    %215 = vmatprep.subr.mxu0 0.0
    %216 = vmatpush1.msra.mxu0 0.0
    %217 = vmatprep.subr.mxu0 0.0
    %218 = vmatpush1.msra.mxu0 0.0
    %219 = vmatprep.subr.mxu0 0.0
    %220 = vmatpush1.msra.mxu0 0.0
    %221 = vmatprep.subr.mxu0 0.0
    %222 = vmatpush1.msra.mxu0 0.0
    %223 = vmatprep.subr.mxu0 0.0
    %224 = vmatpush1.msra.mxu0 0.0
    %225 = vmatprep.subr.mxu0 0.0
    %226 = vmatpush1.msra.mxu0 0.0
    %227 = vmatprep.subr.mxu0 0.0
    %228 = vmatpush1.msra.mxu0 0.0
    %229 = vmatprep.subr.mxu0 0.0
    %230 = vmatpush1.msra.mxu0 0.0
    %231 = vmatprep.subr.mxu0 0.0
    %232 = vmatpush1.msra.mxu0 0.0
    %233 = vmatprep.subr.mxu0 0.0
    %234 = vmatpush1.msra.mxu0 0.0
    %235 = vmatprep.subr.mxu0 0.0
    %236 = vmatpush1.msra.mxu0 0.0
    %237 = vmatprep.mubr.f32.mxu0 0.0
    %238 = vmatmul.mubr.f32.gmra.mrb[0].mxu0 %v171
    %v239 = vpop.f32.mrb[0].mxu0
    %v240 = vadd.f32 %v137, %v239
    %v241 = vpop.f32.mrb[0].mxu0
    %v242 = vadd.f32 %v141, %v241
    %243 = vdwg.mxu0
    %244 = vmatprep.subr.mxu0 %v79
    %245 = vmatpush1.msra.mxu0 %v78
    %246 = vmatprep.subr.mxu0 %v86
    %247 = vmatpush1.msra.mxu0 %v85
    %248 = vmatprep.subr.mxu0 %v93
    %249 = vmatpush1.msra.mxu0 %v92
    %250 = vmatprep.subr.mxu0 %v100
    %251 = vmatpush1.msra.mxu0 %v99
    %252 = vmatprep.subr.mxu0 %v107
    %253 = vmatpush1.msra.mxu0 %v106
    %254 = vmatprep.subr.mxu0 %v114
    %255 = vmatpush1.msra.mxu0 %v113
    %256 = vmatprep.subr.mxu0 %v121
    %257 = vmatpush1.msra.mxu0 %v120
    %258 = vmatprep.subr.mxu0 %v128
    %259 = vmatpush1.msra.mxu0 %v127
    %260 = vmatprep.subr.mxu0 0.0
    %261 = vmatpush1.msra.mxu0 0.0
    %262 = vmatprep.subr.mxu0 0.0
    %263 = vmatpush1.msra.mxu0 0.0
    %264 = vmatprep.subr.mxu0 0.0
    %265 = vmatpush1.msra.mxu0 0.0
    %266 = vmatprep.subr.mxu0 0.0
    %267 = vmatpush1.msra.mxu0 0.0
    %268 = vmatprep.subr.mxu0 0.0
    %269 = vmatpush1.msra.mxu0 0.0
    %270 = vmatprep.subr.mxu0 0.0
    %271 = vmatpush1.msra.mxu0 0.0
    %272 = vmatprep.subr.mxu0 0.0
    %273 = vmatpush1.msra.mxu0 0.0
    %274 = vmatprep.subr.mxu0 0.0
    %275 = vmatpush1.msra.mxu0 0.0
    %276 = vmatprep.subr.mxu0 0.0
    %277 = vmatpush1.msra.mxu0 0.0
    %278 = vmatprep.subr.mxu0 0.0
    %279 = vmatpush1.msra.mxu0 0.0
    %280 = vmatprep.subr.mxu0 0.0
    %281 = vmatpush1.msra.mxu0 0.0
    %282 = vmatprep.subr.mxu0 0.0
    %283 = vmatpush1.msra.mxu0 0.0
    %284 = vmatprep.subr.mxu0 0.0
    %285 = vmatpush1.msra.mxu0 0.0
    %286 = vmatprep.subr.mxu0 0.0
    %287 = vmatpush1.msra.mxu0 0.0
    %288 = vmatprep.subr.mxu0 0.0
    %289 = vmatpush1.msra.mxu0 0.0
    %290 = vmatprep.subr.mxu0 0.0
    %291 = vmatpush1.msra.mxu0 0.0
    %292 = vmatprep.subr.mxu0 0.0
    %293 = vmatpush1.msra.mxu0 0.0
    %294 = vmatprep.subr.mxu0 0.0
    %295 = vmatpush1.msra.mxu0 0.0
    %296 = vmatprep.subr.mxu0 0.0
    %297 = vmatpush1.msra.mxu0 0.0
    %298 = vmatprep.subr.mxu0 0.0
    %299 = vmatpush1.msra.mxu0 0.0
    %300 = vmatprep.subr.mxu0 0.0
    %301 = vmatpush1.msra.mxu0 0.0
    %302 = vmatprep.subr.mxu0 0.0
    %303 = vmatpush1.msra.mxu0 0.0
    %304 = vmatprep.subr.mxu0 0.0
    %305 = vmatpush1.msra.mxu0 0.0
    %306 = vmatprep.subr.mxu0 0.0
    %307 = vmatpush1.msra.mxu0 0.0
    %308 = vmatprep.mubr.f32.mxu0 0.0
    %309 = vmatmul.mubr.f32.gmra.mrb[0].mxu0 %v171
    %v310 = vpop.f32.mrb[0].mxu0
    %v311 = vadd.f32 %v145, %v310
    %v312 = vpop.f32.mrb[0].mxu0
    %v313 = vadd.f32 %v149, %v312
    %314 = vdwg.mxu0
    %315 = vmatprep.subr.mxu0 %v81
    %316 = vmatpush1.msra.mxu0 %v80
    %317 = vmatprep.subr.mxu0 %v88
    %318 = vmatpush1.msra.mxu0 %v87
    %319 = vmatprep.subr.mxu0 %v95
    %320 = vmatpush1.msra.mxu0 %v94
    %321 = vmatprep.subr.mxu0 %v102
    %322 = vmatpush1.msra.mxu0 %v101
    %323 = vmatprep.subr.mxu0 %v109
    %324 = vmatpush1.msra.mxu0 %v108
    %325 = vmatprep.subr.mxu0 %v116
    %326 = vmatpush1.msra.mxu0 %v115
    %327 = vmatprep.subr.mxu0 %v123
    %328 = vmatpush1.msra.mxu0 %v122
    %329 = vmatprep.subr.mxu0 %v130
    %330 = vmatpush1.msra.mxu0 %v129
    %331 = vmatprep.subr.mxu0 0.0
    %332 = vmatpush1.msra.mxu0 0.0
    %333 = vmatprep.subr.mxu0 0.0
    %334 = vmatpush1.msra.mxu0 0.0
    %335 = vmatprep.subr.mxu0 0.0
    %336 = vmatpush1.msra.mxu0 0.0
    %337 = vmatprep.subr.mxu0 0.0
    %338 = vmatpush1.msra.mxu0 0.0
    %339 = vmatprep.subr.mxu0 0.0
    %340 = vmatpush1.msra.mxu0 0.0
    %341 = vmatprep.subr.mxu0 0.0
    %342 = vmatpush1.msra.mxu0 0.0
    %343 = vmatprep.subr.mxu0 0.0
    %344 = vmatpush1.msra.mxu0 0.0
    %345 = vmatprep.subr.mxu0 0.0
    %346 = vmatpush1.msra.mxu0 0.0
    %347 = vmatprep.subr.mxu0 0.0
    %348 = vmatpush1.msra.mxu0 0.0
    %349 = vmatprep.subr.mxu0 0.0
    %350 = vmatpush1.msra.mxu0 0.0
    %351 = vmatprep.subr.mxu0 0.0
    %352 = vmatpush1.msra.mxu0 0.0
    %353 = vmatprep.subr.mxu0 0.0
    %354 = vmatpush1.msra.mxu0 0.0
    %355 = vmatprep.subr.mxu0 0.0
    %356 = vmatpush1.msra.mxu0 0.0
    %357 = vmatprep.subr.mxu0 0.0
    %358 = vmatpush1.msra.mxu0 0.0
    %359 = vmatprep.subr.mxu0 0.0
    %360 = vmatpush1.msra.mxu0 0.0
    %361 = vmatprep.subr.mxu0 0.0
    %362 = vmatpush1.msra.mxu0 0.0
    %363 = vmatprep.subr.mxu0 0.0
    %364 = vmatpush1.msra.mxu0 0.0
    %365 = vmatprep.subr.mxu0 0.0
    %366 = vmatpush1.msra.mxu0 0.0
    %367 = vmatprep.subr.mxu0 0.0
    %368 = vmatpush1.msra.mxu0 0.0
    %369 = vmatprep.subr.mxu0 0.0
    %370 = vmatpush1.msra.mxu0 0.0
    %371 = vmatprep.subr.mxu0 0.0
    %372 = vmatpush1.msra.mxu0 0.0
    %373 = vmatprep.subr.mxu0 0.0
    %374 = vmatpush1.msra.mxu0 0.0
    %375 = vmatprep.subr.mxu0 0.0
    %376 = vmatpush1.msra.mxu0 0.0
    %377 = vmatprep.subr.mxu0 0.0
    %378 = vmatpush1.msra.mxu0 0.0
    %379 = vmatprep.mubr.f32.mxu0 0.0
    %380 = vmatmul.mubr.f32.gmra.mrb[0].mxu0 %v171
    %v381 = vpop.f32.mrb[0].mxu0
    %v382 = vadd.f32 %v153, %v381
    %v383 = vpop.f32.mrb[0].mxu0
    %v384 = vadd.f32 %v157, %v383
    %385 = vdwg.mxu0
    %386 = vmatprep.subr.mxu0 0.0
    %387 = vmatpush1.msra.mxu0 %v82
    %388 = vmatprep.subr.mxu0 0.0
    %389 = vmatpush1.msra.mxu0 %v89
    %390 = vmatprep.subr.mxu0 0.0
    %391 = vmatpush1.msra.mxu0 %v96
    %392 = vmatprep.subr.mxu0 0.0
    %393 = vmatpush1.msra.mxu0 %v103
    %394 = vmatprep.subr.mxu0 0.0
    %395 = vmatpush1.msra.mxu0 %v110
    %396 = vmatprep.subr.mxu0 0.0
    %397 = vmatpush1.msra.mxu0 %v117
    %398 = vmatprep.subr.mxu0 0.0
    %399 = vmatpush1.msra.mxu0 %v124
    %400 = vmatprep.subr.mxu0 0.0
    %401 = vmatpush1.msra.mxu0 %v131
    %402 = vmatprep.subr.mxu0 0.0
    %403 = vmatpush1.msra.mxu0 0.0
    %404 = vmatprep.subr.mxu0 0.0
    %405 = vmatpush1.msra.mxu0 0.0
    %406 = vmatprep.subr.mxu0 0.0
    %407 = vmatpush1.msra.mxu0 0.0
    %408 = vmatprep.subr.mxu0 0.0
    %409 = vmatpush1.msra.mxu0 0.0
    %410 = vmatprep.subr.mxu0 0.0
    %411 = vmatpush1.msra.mxu0 0.0
    %412 = vmatprep.subr.mxu0 0.0
    %413 = vmatpush1.msra.mxu0 0.0
    %414 = vmatprep.subr.mxu0 0.0
    %415 = vmatpush1.msra.mxu0 0.0
    %416 = vmatprep.subr.mxu0 0.0
    %417 = vmatpush1.msra.mxu0 0.0
    %418 = vmatprep.subr.mxu0 0.0
    %419 = vmatpush1.msra.mxu0 0.0
    %420 = vmatprep.subr.mxu0 0.0
    %421 = vmatpush1.msra.mxu0 0.0
    %422 = vmatprep.subr.mxu0 0.0
    %423 = vmatpush1.msra.mxu0 0.0
    %424 = vmatprep.subr.mxu0 0.0
    %425 = vmatpush1.msra.mxu0 0.0
    %426 = vmatprep.subr.mxu0 0.0
    %427 = vmatpush1.msra.mxu0 0.0
    %428 = vmatprep.subr.mxu0 0.0
    %429 = vmatpush1.msra.mxu0 0.0
    %430 = vmatprep.subr.mxu0 0.0
    %431 = vmatpush1.msra.mxu0 0.0
    %432 = vmatprep.subr.mxu0 0.0
    %433 = vmatpush1.msra.mxu0 0.0
    %434 = vmatprep.subr.mxu0 0.0
    %435 = vmatpush1.msra.mxu0 0.0
    %436 = vmatprep.subr.mxu0 0.0
    %437 = vmatpush1.msra.mxu0 0.0
    %438 = vmatprep.subr.mxu0 0.0
    %439 = vmatpush1.msra.mxu0 0.0
    %440 = vmatprep.subr.mxu0 0.0
    %441 = vmatpush1.msra.mxu0 0.0
    %442 = vmatprep.subr.mxu0 0.0
    %443 = vmatpush1.msra.mxu0 0.0
    %444 = vmatprep.subr.mxu0 0.0
    %445 = vmatpush1.msra.mxu0 0.0
    %446 = vmatprep.subr.mxu0 0.0
    %447 = vmatpush1.msra.mxu0 0.0
    %448 = vmatprep.subr.mxu0 0.0
    %449 = vmatpush1.msra.mxu0 0.0
    %450 = vmatprep.mubr.f32.mxu0 0.0
    %451 = vmatmul.mubr.f32.gmra.mrb[0].mxu0 %v171
    %v452 = vpop.f32.mrb[0].mxu0
    %v453 = vadd.f32 %v161, %v452
    %v454 = vpop.f32.mrb[0].mxu0
    %455 = vdwg.mxu0
    %456 = vst [vmem:[#allocation5] sm:$0xff] %v240
    %457 = vst [vmem:[#allocation5 + $0x8] sm:$0xff] %v242
    %458 = vst [vmem:[#allocation5 + $0x10] sm:$0xff] %v311
    %459 = vst [vmem:[#allocation5 + $0x18] sm:$0xff] %v313
    %460 = vst [vmem:[#allocation5 + $0x20] sm:$0xff] %v382
    %461 = vst [vmem:[#allocation5 + $0x28] sm:$0xff] %v384
    %462 = vst [vmem:[#allocation5 + $0x30] sm:$0xff] %v453
    // Predicated region
    $region26: #{tpu_custom_call.1} parent=1 // pred_check
      _
    $region27: #{tpu_custom_call.1} parent=1 // pred_check_branch
      %464 = sbr.rel (0) target = $region29
    $region28: #{tpu_custom_call.1} parent=1 // pred_region
      %s466 = ssub.s32 896, 896
      %467 = vsyncadd [#allocation4], %s466
      %s469 = sshll.u32 [#allocation5], 4
      %s470 = int_to_ptr.vmem [resolvable:$true] %s469
      %472 = dma.vmem_to_hbm [thread:$0]  %s470, 896, %s5, [#allocation4]
    $region29: #{tpu_custom_call.1} parent=1 // pred_fallthru
      _
    // Predicated region
    $region30: #{tpu_custom_call.1} parent=1 // pred_check
      _
    $region31: #{tpu_custom_call.1} parent=1 // pred_check_branch
      %474 = sbr.rel (0) target = $region33
    $region32: #{tpu_custom_call.1} parent=1 // pred_region
      %475 = dma.done [#allocation4], 896
    $region33: #{tpu_custom_call.1} parent=1 // pred_fallthru
      _
    %476 = vsyncpa [#allocation3], 1
    %477 = vsyncpa [#allocation4], 1

</llo_original>
